<compile_context>
chip_gen: v7x
topology: tpu7x:2x2x1
jax: 0.10.0
libtpu: 0.0.40
codegen_flags: <defaults>
</compile_context>

<pallas_src>
import functools

import jax
import jax.numpy as jnp
from jax import lax
from jax.experimental import pallas as pl
from jax.experimental.pallas import tpu as pltpu


def _round_up(a: int, b: int) -> int:
    return (a + b - 1) // b * b


def _mlp_kernel(x_ref, w1_ref, b1_ref, w2_ref, b2_ref, o_ref, acc_ref, *,
                tanh_gelu: bool):
    k = pl.program_id(1)

    @pl.when(k == 0)
    def _():
        acc_ref[...] = jnp.zeros_like(acc_ref)

    # lin1 tile: (tm, E) @ (E, th) -> (tm, th), f32 accumulate on the MXU.
    x = x_ref[...]
    h = jnp.dot(x, w1_ref[...], preferred_element_type=jnp.float32)
    h = h + b1_ref[...]                      # bias in f32

    if tanh_gelu:
        # tanh approximation (uses the EUP slot) — opt-in for VALU-bound v5e.
        h = 0.5 * h * (1.0 + jnp.tanh(
            0.7978845608028654 * (h + 0.044715 * h * h * h)))
    else:
        # exact GELU: 0.5 * x * (1 + erf(x / sqrt(2))) — matches PyTorch
        # nn.GELU(approximate='none').
        h = 0.5 * h * (1.0 + lax.erf(h * 0.7071067811865476))

    # lin2 partial: (tm, th) @ (th, E) accumulated into the f32 scratch.
    acc_ref[...] += jnp.dot(h.astype(w2_ref.dtype), w2_ref[...],
                            preferred_element_type=jnp.float32)

    @pl.when(k == pl.num_programs(1) - 1)
    def _():
        o_ref[...] = (acc_ref[...] + b2_ref[...]).astype(o_ref.dtype)


def mlp_block(x, w1, b1, w2, b2, *, tm: int = 512, th: int = 512,
              compute_dtype=jnp.bfloat16, tanh_gelu: bool = False):
    """MLPBlock forward: lin2(GELU(lin1(x))).

    x: (..., E); w1: (E, H), b1: (H,); w2: (H, E), b2: (E,).
    Weights are stored pre-transposed as (in_features, out_features).
    """
    E = x.shape[-1]
    H = w1.shape[-1]
    lead = x.shape[:-1]
    out_dtype = x.dtype

    x2d = x.reshape(-1, E)
    M = x2d.shape[0]

    # --- tile sizes (clamped to the problem, TPU-aligned) -------------------
    tm_eff = min(tm, _round_up(M, 8))          # multiple of 8 sublanes
    th_eff = min(th, H)                        # th is a multiple of 128, or == H
    M_pad = _round_up(M, tm_eff)
    H_pad = _round_up(H, th_eff)

    # --- padding (zeros are exact no-ops through bias/GELU/matmul) ----------
    if M_pad != M:
        x2d = jnp.pad(x2d, ((0, M_pad - M), (0, 0)))
    if H_pad != H:
        w1 = jnp.pad(w1, ((0, 0), (0, H_pad - H)))
        b1 = jnp.pad(b1, ((0, H_pad - H),))
        w2 = jnp.pad(w2, ((0, H_pad - H), (0, 0)))

    # MXU operands in compute_dtype (bf16 by default); biases stay f32.
    x2d = x2d.astype(compute_dtype)
    w1c = w1.astype(compute_dtype)
    w2c = w2.astype(compute_dtype)
    b1_2d = b1.reshape(1, H_pad).astype(jnp.float32)
    b2_2d = b2.reshape(1, E).astype(jnp.float32)

    grid = (M_pad // tm_eff, H_pad // th_eff)

    cd_b = jnp.dtype(compute_dtype).itemsize
    out_b = jnp.dtype(out_dtype).itemsize

    # VMEM budget: double-buffered x/out/weight tiles + biases + f32 acc +
    # headroom for the (tm, th) activation tile.  Capped well under v7x's
    # 64 MiB physical VMEM for the default tile table.
    vmem_est = (2 * tm_eff * E * cd_b            # x tiles
                + 2 * tm_eff * E * out_b         # out tiles
                + 2 * E * th_eff * cd_b          # W1 tiles
                + 2 * th_eff * E * cd_b          # W2 tiles
                + 2 * th_eff * 4 + E * 4         # biases
                + tm_eff * E * 4                 # f32 accumulator scratch
                + tm_eff * th_eff * 4)           # activation headroom
    vmem_limit = int(min(max(vmem_est * 5 // 4 + (2 << 20), 32 << 20), 96 << 20))

    cost = pl.CostEstimate(
        flops=4 * M * E * H,
        transcendentals=M * H,
        bytes_accessed=(M_pad * E * cd_b + E * H_pad * cd_b + H_pad * 4
                        + H_pad * E * cd_b + E * 4 + M_pad * E * out_b),
    )

    kernel = functools.partial(_mlp_kernel, tanh_gelu=tanh_gelu)

    out = pl.pallas_call(
        kernel,
        out_shape=jax.ShapeDtypeStruct((M_pad, E), out_dtype),
        grid_spec=pltpu.PrefetchScalarGridSpec(
            num_scalar_prefetch=0,
            grid=grid,                                        # (tokens, H) — reduction last
            in_specs=[
                pl.BlockSpec((tm_eff, E), lambda i, k: (i, 0)),   # x tile (resident over k)
                pl.BlockSpec((E, th_eff), lambda i, k: (0, k)),   # W1 slab (streamed over H)
                pl.BlockSpec((1, th_eff), lambda i, k: (0, k)),   # b1 slab
                pl.BlockSpec((th_eff, E), lambda i, k: (k, 0)),   # W2 slab (streamed over H)
                pl.BlockSpec((1, E), lambda i, k: (0, 0),
                             pipeline_mode=pl.Buffered(1)),       # b2 (constant -> 1 buffer)
            ],
            out_specs=pl.BlockSpec((tm_eff, E), lambda i, k: (i, 0)),
            scratch_shapes=[pltpu.VMEM((tm_eff, E), jnp.float32)],
        ),
        compiler_params=pltpu.CompilerParams(
            dimension_semantics=("parallel", "arbitrary"),
            vmem_limit_bytes=vmem_limit,
        ),
        cost_estimate=cost,
    )(x2d, w1c, b1_2d, w2c, b2_2d)

    if M_pad != M:
        out = out[:M]
    return out.reshape(*lead, E)


def _reference(x, w1, b1, w2, b2):
    h = x @ w1 + b1
    h = 0.5 * h * (1.0 + lax.erf(h / jnp.sqrt(2.0)))
    return h @ w2 + b2


if __name__ == "__main__":
    # Small shapes implied by the module: tokens (batch, seq, embedding_dim).
    batch, seq = 2, 8
    embedding_dim, mlp_dim = 32, 64

    key = jax.random.PRNGKey(0)
    kx, kw1, kb1, kw2, kb2 = jax.random.split(key, 5)

    x = jax.random.normal(kx, (batch, seq, embedding_dim), dtype=jnp.float32)

    # Deterministic parameter init (PyTorch Linear stores weight as (out, in);
    # we keep the transposed (in, out) layout for the kernel).
    bound1 = 1.0 / (embedding_dim ** 0.5)
    bound2 = 1.0 / (mlp_dim ** 0.5)
    w1 = jax.random.uniform(kw1, (embedding_dim, mlp_dim), jnp.float32, -bound1, bound1)
    b1 = jax.random.uniform(kb1, (mlp_dim,), jnp.float32, -bound1, bound1)
    w2 = jax.random.uniform(kw2, (mlp_dim, embedding_dim), jnp.float32, -bound2, bound2)
    b2 = jax.random.uniform(kb2, (embedding_dim,), jnp.float32, -bound2, bound2)

    ref = _reference(x.reshape(-1, embedding_dim), w1, b1, w2, b2)
    ref = ref.reshape(batch, seq, embedding_dim)

    # f32-operand path: tight tolerance vs f32 reference.
    out_f32 = jax.block_until_ready(
        mlp_block(x, w1, b1, w2, b2, compute_dtype=jnp.float32))
    assert out_f32.shape == (batch, seq, embedding_dim)
    assert jnp.allclose(out_f32, ref, atol=1e-5, rtol=1e-5)

    # Default bf16-MXU path (f32 accumulate): loosened tolerance vs the f32
    # PyTorch-equivalent reference.
    out_bf16 = jax.block_until_ready(mlp_block(x, w1, b1, w2, b2))
    assert out_bf16.shape == (batch, seq, embedding_dim)
    assert jnp.allclose(out_bf16, ref, atol=5e-2, rtol=5e-2)

    print("KERNEL_OK")
</pallas_src>

<mosaic_0001>
module attributes {stable_mosaic.version = 11 : i64} {
  func.func @_mlp_kernel(%arg0: i32, %arg1: i32, %arg2: memref<16x32xf32, #tpu.memory_space<vmem>>, %arg3: memref<32x64xf32, #tpu.memory_space<vmem>>, %arg4: memref<1x64xf32, #tpu.memory_space<vmem>>, %arg5: memref<64x32xf32, #tpu.memory_space<vmem>>, %arg6: memref<1x32xf32, #tpu.memory_space<vmem>>, %arg7: memref<16x32xf32, #tpu.memory_space<vmem>>, %arg8: memref<16x32xf32, #tpu.memory_space<vmem>>) attributes {dimension_semantics = [#tpu.dimension_semantics<parallel>, #tpu.dimension_semantics<arbitrary>], iteration_bounds = array<i64: 1, 1>, scalar_prefetch = 0 : i64, scratch_operands = 1 : i64, tpu.core_type = #tpu.core_type<tc>, window_params = [{transform_indices = @transform_0, window_bounds = array<i64: 16, 32>}, {transform_indices = @transform_1, window_bounds = array<i64: 32, 64>}, {transform_indices = @transform_2, window_bounds = array<i64: 1, 64>}, {transform_indices = @transform_3, window_bounds = array<i64: 64, 32>}, {pipeline_mode = #tpu.pipeline_mode<synchronous>, transform_indices = @transform_4, window_bounds = array<i64: 1, 32>}, {transform_indices = @transform_5, window_bounds = array<i64: 16, 32>}]} {
    %c0_i32 = arith.constant 0 : i32
    %0 = arith.cmpi eq, %arg1, %c0_i32 : i32
    %1 = arith.extui %0 : i1 to i32
    %c0_i32_0 = arith.constant 0 : i32
    %2 = arith.cmpi ne, %1, %c0_i32_0 : i32
    scf.if %2 {
      %cst_18 = arith.constant 0.000000e+00 : f32
      %25 = vector.broadcast %cst_18 : f32 to vector<16x32xf32>
      %c0_19 = arith.constant 0 : index
      %c0_20 = arith.constant 0 : index
      %26 = vector.load %arg8[%c0_19, %c0_20] : memref<16x32xf32, #tpu.memory_space<vmem>>, vector<16x32xf32>
      tpu.vector_store %arg8[%c0_19, %c0_20], %25 {strides = array<i32>} : memref<16x32xf32, #tpu.memory_space<vmem>>, vector<16x32xf32>,
    } else {
    }
    %c0 = arith.constant 0 : index
    %c0_1 = arith.constant 0 : index
    %3 = vector.load %arg2[%c0, %c0_1] : memref<16x32xf32, #tpu.memory_space<vmem>>, vector<16x32xf32>
    %c0_2 = arith.constant 0 : index
    %c0_3 = arith.constant 0 : index
    %4 = vector.load %arg3[%c0_2, %c0_3] : memref<32x64xf32, #tpu.memory_space<vmem>>, vector<32x64xf32>
    %cst = arith.constant dense<0.000000e+00> : vector<16x64xf32>
    %5 = tpu.matmul %3, %4, %cst {dimension_numbers = #tpu.dot_dimension_numbers<[1], [0], [0], [1], [0, 0, 1, 1], [], []>} : vector<16x32xf32>, vector<32x64xf32>, vector<16x64xf32> -> vector<16x64xf32>
    %c0_4 = arith.constant 0 : index
    %c0_5 = arith.constant 0 : index
    %6 = vector.load %arg4[%c0_4, %c0_5] : memref<1x64xf32, #tpu.memory_space<vmem>>, vector<1x64xf32>
    %7 = vector.broadcast %6 : vector<1x64xf32> to vector<16x64xf32>
    %8 = arith.addf %5, %7 : vector<16x64xf32>
    %cst_6 = arith.constant 5.000000e-01 : f32
    %9 = vector.broadcast %cst_6 : f32 to vector<16x64xf32>
    %10 = arith.mulf %9, %8 : vector<16x64xf32>
    %cst_7 = arith.constant 0.707106769 : f32
    %11 = vector.broadcast %cst_7 : f32 to vector<16x64xf32>
    %12 = arith.mulf %8, %11 : vector<16x64xf32>
    %13 = math.erf %12 : vector<16x64xf32>
    %cst_8 = arith.constant 1.000000e+00 : f32
    %14 = vector.broadcast %cst_8 : f32 to vector<16x64xf32>
    %15 = arith.addf %14, %13 : vector<16x64xf32>
    %16 = arith.mulf %10, %15 : vector<16x64xf32>
    %c0_9 = arith.constant 0 : index
    %c0_10 = arith.constant 0 : index
    %17 = vector.load %arg8[%c0_9, %c0_10] : memref<16x32xf32, #tpu.memory_space<vmem>>, vector<16x32xf32>
    %c0_11 = arith.constant 0 : index
    %c0_12 = arith.constant 0 : index
    %18 = vector.load %arg5[%c0_11, %c0_12] : memref<64x32xf32, #tpu.memory_space<vmem>>, vector<64x32xf32>
    %cst_13 = arith.constant dense<0.000000e+00> : vector<16x32xf32>
    %19 = tpu.matmul %16, %18, %cst_13 {dimension_numbers = #tpu.dot_dimension_numbers<[1], [0], [0], [1], [0, 0, 1, 1], [], []>} : vector<16x64xf32>, vector<64x32xf32>, vector<16x32xf32> -> vector<16x32xf32>
    %20 = arith.addf %17, %19 : vector<16x32xf32>
    %c0_14 = arith.constant 0 : index
    %c0_15 = arith.constant 0 : index
    %21 = vector.load %arg8[%c0_14, %c0_15] : memref<16x32xf32, #tpu.memory_space<vmem>>, vector<16x32xf32>
    tpu.vector_store %arg8[%c0_14, %c0_15], %20 {strides = array<i32>} : memref<16x32xf32, #tpu.memory_space<vmem>>, vector<16x32xf32>,
    %c0_i32_16 = arith.constant 0 : i32
    %22 = arith.cmpi eq, %arg1, %c0_i32_16 : i32
    %23 = arith.extui %22 : i1 to i32
    %c0_i32_17 = arith.constant 0 : i32
    %24 = arith.cmpi ne, %23, %c0_i32_17 : i32
    scf.if %24 {
      %c0_18 = arith.constant 0 : index
      %c0_19 = arith.constant 0 : index
      %25 = vector.load %arg8[%c0_18, %c0_19] : memref<16x32xf32, #tpu.memory_space<vmem>>, vector<16x32xf32>
      %c0_20 = arith.constant 0 : index
      %c0_21 = arith.constant 0 : index
      %26 = vector.load %arg6[%c0_20, %c0_21] : memref<1x32xf32, #tpu.memory_space<vmem>>, vector<1x32xf32>
      %27 = vector.broadcast %26 : vector<1x32xf32> to vector<16x32xf32>
      %28 = arith.addf %25, %27 : vector<16x32xf32>
      %c0_22 = arith.constant 0 : index
      %c0_23 = arith.constant 0 : index
      %29 = vector.load %arg7[%c0_22, %c0_23] : memref<16x32xf32, #tpu.memory_space<vmem>>, vector<16x32xf32>
      tpu.vector_store %arg7[%c0_22, %c0_23], %28 {strides = array<i32>} : memref<16x32xf32, #tpu.memory_space<vmem>>, vector<16x32xf32>,
    } else {
    }
    return
  }
  func.func @transform_0(%arg0: i32, %arg1: i32) -> (i32, i32) {
    %c0_i32 = arith.constant 0 : i32
    %c0_i32_0 = arith.constant 0 : i32
    return %arg0, %c0_i32 : i32, i32
  }
  func.func @transform_1(%arg0: i32, %arg1: i32) -> (i32, i32) {
    %c0_i32 = arith.constant 0 : i32
    %c0_i32_0 = arith.constant 0 : i32
    return %c0_i32, %arg1 : i32, i32
  }
  func.func @transform_2(%arg0: i32, %arg1: i32) -> (i32, i32) {
    %c0_i32 = arith.constant 0 : i32
    %c0_i32_0 = arith.constant 0 : i32
    return %c0_i32, %arg1 : i32, i32
  }
  func.func @transform_3(%arg0: i32, %arg1: i32) -> (i32, i32) {
    %c0_i32 = arith.constant 0 : i32
    %c0_i32_0 = arith.constant 0 : i32
    return %arg1, %c0_i32 : i32, i32
  }
  func.func @transform_4(%arg0: i32, %arg1: i32) -> (i32, i32) {
    %c0_i32 = arith.constant 0 : i32
    %c0_i32_0 = arith.constant 0 : i32
    %c0_i32_1 = arith.constant 0 : i32
    return %c0_i32, %c0_i32_0 : i32, i32
  }
  func.func @transform_5(%arg0: i32, %arg1: i32) -> (i32, i32) {
    %c0_i32 = arith.constant 0 : i32
    %c0_i32_0 = arith.constant 0 : i32
    return %arg0, %c0_i32 : i32, i32
  }
}

</mosaic_0001>

<llo_original>
// kernel: tpu_custom_call.1
$region0: #{tpu_custom_call.1}
  #allocation0 [shape = 'u32[]', space=smem, size = 0x4, offset = 0x4, fixed_abs, tag = 'smem constant byte address 0x4 - core index']
  #allocation1 [shape = 'u32[144,128]{1,0:T(1,128)}', space=vmem, size = 0x12000, scoped, tag = 'internal scratch']
  #allocation2 [shape = 'f32[16,32]{1,0:T(8,128)}', space=vmem, size = 0x2000, scoped, tag = 'scratch operand']
  %s0 = inlined_call_operand.vmem [shape: f32[16,32], index: 0, kind: input, shape index: {}]
  %s1 = inlined_call_operand.vmem [shape: f32[32,64], index: 1, kind: input, shape index: {}]
  %s2 = inlined_call_operand.vmem [shape: f32[1,64], index: 2, kind: input, shape index: {}]
  %s3 = inlined_call_operand.vmem [shape: f32[64,32], index: 3, kind: input, shape index: {}]
  %s4 = inlined_call_operand.vmem [shape: f32[1,32], index: 4, kind: input, shape index: {}]
  %s5 = inlined_call_operand.hbm [shape: f32[16,32], index: 5, kind: output, shape index: {}]
  %s6 = sld [smem:[#allocation0]]
  $region38: #{tpu_custom_call.1} parent=0
    _
  %s8 = ssub.s32 1, %s6
  %s9 = scalar_select 0, %s8, %s6
  $region1: #{tpu_custom_call.1} parent=0
    #allocation3 [shape = 'u8[8192]{0}', space=vmem, size = 0x2000, scoped, tag = 'output window, operand 0, single buffered']
    #allocation4 [shape = 's32[1]{0}', space=sflag, size = 0x4, scoped, tag = 'scoped memory for tpu_custom_call.1']
    %10 = vsyncpa [#allocation4], 0
    // Predicated region
    $region2: #{tpu_custom_call.1} parent=1 // pred_check
      _
    $region3: #{tpu_custom_call.1} parent=1 // pred_check_branch
      %12 = sbr.rel (0) target = $region5
    $region4: #{tpu_custom_call.1} parent=1 // pred_region
      _
    $region5: #{tpu_custom_call.1} parent=1 // pred_fallthru
      _
    // Predicated region
    $region6: #{tpu_custom_call.1} parent=1 // pred_check
      _
    $region7: #{tpu_custom_call.1} parent=1 // pred_check_branch
      %14 = sbr.rel (0) target = $region9
    $region8: #{tpu_custom_call.1} parent=1 // pred_region
      _
    $region9: #{tpu_custom_call.1} parent=1 // pred_fallthru
      _
    // Predicated region
    $region10: #{tpu_custom_call.1} parent=1 // pred_check
      _
    $region11: #{tpu_custom_call.1} parent=1 // pred_check_branch
      %16 = sbr.rel (0) target = $region13
    $region12: #{tpu_custom_call.1} parent=1 // pred_region
      _
    $region13: #{tpu_custom_call.1} parent=1 // pred_fallthru
      _
    // Predicated region
    $region14: #{tpu_custom_call.1} parent=1 // pred_check
      _
    $region15: #{tpu_custom_call.1} parent=1 // pred_check_branch
      %18 = sbr.rel (0) target = $region17
    $region16: #{tpu_custom_call.1} parent=1 // pred_region
      _
    $region17: #{tpu_custom_call.1} parent=1 // pred_fallthru
      _
    // Predicated region
    $region18: #{tpu_custom_call.1} parent=1 // pred_check
      _
    $region19: #{tpu_custom_call.1} parent=1 // pred_check_branch
      %20 = sbr.rel (0) target = $region21
    $region20: #{tpu_custom_call.1} parent=1 // pred_region
      _
    $region21: #{tpu_custom_call.1} parent=1 // pred_fallthru
      _
    %p21 = scmp.eq.s32.totalorder 0, 0
    // Predicated region
    $region22: #{tpu_custom_call.1} parent=1 // pred_check
      %p22 = pneg %p21
    $region23: #{tpu_custom_call.1} parent=1 // pred_check_branch
      %24 = sbr.rel (%p22) target = $region25
    $region24: #{tpu_custom_call.1} parent=1 // pred_region
      %vm25 = vcmask 261120
      %26 = vst.msk [vmem:[#allocation2] sm:$0xff] %vm25, 0.0
      %27 = vst.msk [vmem:[#allocation2 + $0x8] sm:$0xff] %vm25, 0.0
    $region25: #{tpu_custom_call.1} parent=1 // pred_fallthru
      _
    %v28 = vld [vmem:[%s0] sm:$0xff]
    %v29 = vld [vmem:[%s0 + $0x8] sm:$0xff]
    %v30 = vld [vmem:[%s1] sm:$0xff]
    %v31 = vld [vmem:[%s1 + $0x8] sm:$0xff]
    %v32 = vld [vmem:[%s1 + $0x10] sm:$0xff]
    %v33 = vld [vmem:[%s1 + $0x18] sm:$0xff]
    %v34 = vld [vmem:[%s2] sm:$0x1]
    %v36 = vlaneseq
    %v37 = vshrl.u32 %v36, 7
    %v38 = vsub.s32 0, %v37
    %v39 = vrot.slane %v34, %v38
    %vm41 = vcmask 261120
    %v43 = vsel %vm41, %v28, 0
    %v46 = vsel %vm41, %v29, 0
    %48 = vmatprep.subr.mxu0 0.0
    %49 = vmatpush1.msra.mxu0 %v30
    %50 = vmatprep.subr.mxu0 0.0
    %51 = vmatpush1.msra.mxu0 %v31
    %52 = vmatprep.subr.mxu0 0.0
    %53 = vmatpush1.msra.mxu0 %v32
    %54 = vmatprep.subr.mxu0 0.0
    %55 = vmatpush1.msra.mxu0 %v33
    %56 = vmatprep.subr.mxu0 0.0
    %57 = vmatpush1.msra.mxu0 0.0
    %58 = vmatprep.subr.mxu0 0.0
    %59 = vmatpush1.msra.mxu0 0.0
    %60 = vmatprep.subr.mxu0 0.0
    %61 = vmatpush1.msra.mxu0 0.0
    %62 = vmatprep.subr.mxu0 0.0
    %63 = vmatpush1.msra.mxu0 0.0
    %64 = vmatprep.subr.mxu0 0.0
    %65 = vmatpush1.msra.mxu0 0.0
    %66 = vmatprep.subr.mxu0 0.0
    %67 = vmatpush1.msra.mxu0 0.0
    %68 = vmatprep.subr.mxu0 0.0
    %69 = vmatpush1.msra.mxu0 0.0
    %70 = vmatprep.subr.mxu0 0.0
    %71 = vmatpush1.msra.mxu0 0.0
    %72 = vmatprep.subr.mxu0 0.0
    %73 = vmatpush1.msra.mxu0 0.0
    %74 = vmatprep.subr.mxu0 0.0
    %75 = vmatpush1.msra.mxu0 0.0
    %76 = vmatprep.subr.mxu0 0.0
    %77 = vmatpush1.msra.mxu0 0.0
    %78 = vmatprep.subr.mxu0 0.0
    %79 = vmatpush1.msra.mxu0 0.0
    %80 = vmatprep.subr.mxu0 0.0
    %81 = vmatpush1.msra.mxu0 0.0
    %82 = vmatprep.subr.mxu0 0.0
    %83 = vmatpush1.msra.mxu0 0.0
    %84 = vmatprep.subr.mxu0 0.0
    %85 = vmatpush1.msra.mxu0 0.0
    %86 = vmatprep.subr.mxu0 0.0
    %87 = vmatpush1.msra.mxu0 0.0
    %88 = vmatprep.subr.mxu0 0.0
    %89 = vmatpush1.msra.mxu0 0.0
    %90 = vmatprep.subr.mxu0 0.0
    %91 = vmatpush1.msra.mxu0 0.0
    %92 = vmatprep.subr.mxu0 0.0
    %93 = vmatpush1.msra.mxu0 0.0
    %94 = vmatprep.subr.mxu0 0.0
    %95 = vmatpush1.msra.mxu0 0.0
    %96 = vmatprep.subr.mxu0 0.0
    %97 = vmatpush1.msra.mxu0 0.0
    %98 = vmatprep.subr.mxu0 0.0
    %99 = vmatpush1.msra.mxu0 0.0
    %100 = vmatprep.subr.mxu0 0.0
    %101 = vmatpush1.msra.mxu0 0.0
    %102 = vmatprep.subr.mxu0 0.0
    %103 = vmatpush1.msra.mxu0 0.0
    %104 = vmatprep.subr.mxu0 0.0
    %105 = vmatpush1.msra.mxu0 0.0
    %106 = vmatprep.subr.mxu0 0.0
    %107 = vmatpush1.msra.mxu0 0.0
    %108 = vmatprep.subr.mxu0 0.0
    %109 = vmatpush1.msra.mxu0 0.0
    %110 = vmatprep.subr.mxu0 0.0
    %111 = vmatpush1.msra.mxu0 0.0
    %112 = vmatprep.mubr.f32.mxu0 0.0
    %113 = vmatmul.mubr.f32.gmra.mrb[0].mxu0 %v43
    %v114 = vpop.f32.mrb[0].mxu0
    %v115 = vadd.f32 %v39, %v114
    %v116 = vpop.f32.mrb[0].mxu0
    %117 = vmatprep.mubr.f32.mxu0 0.0
    %118 = vmatmul.mubr.f32.gmra.mrb[0].mxu0 %v46
    %v119 = vpop.f32.mrb[0].mxu0
    %v120 = vadd.f32 %v39, %v119
    %v121 = vpop.f32.mrb[0].mxu0
    %122 = vdwg.mxu0
    %v123 = vmul.f32 %v115, 0.5
    %v124 = vmul.f32 %v120, 0.5
    %v125 = vmul.f32 %v115, 0.70710677
    %v126 = vmul.f32 %v120, 0.70710677
    %v127 = verf.f32.pop %v125
    %v128 = verf.f32.pop %v126
    %v129 = vadd.f32 %v127, 1.0
    %v130 = vadd.f32 %v128, 1.0
    %v131 = vmul.f32 %v123, %v129
    %v132 = vmul.f32 %v124, %v130
    %v133 = vld [vmem:[#allocation2] sm:$0xff]
    %v134 = vld [vmem:[#allocation2 + $0x8] sm:$0xff]
    %v135 = vld [vmem:[%s3] sm:$0xff]
    %v136 = vld [vmem:[%s3 + $0x8] sm:$0xff]
    %v137 = vld [vmem:[%s3 + $0x10] sm:$0xff]
    %v138 = vld [vmem:[%s3 + $0x18] sm:$0xff]
    %v139 = vld [vmem:[%s3 + $0x20] sm:$0xff]
    %v140 = vld [vmem:[%s3 + $0x28] sm:$0xff]
    %v141 = vld [vmem:[%s3 + $0x30] sm:$0xff]
    %v142 = vld [vmem:[%s3 + $0x38] sm:$0xff]
    %vm143 = vcmask 523264
    %v145 = vsel %vm143, %v131, 0
    %v148 = vsel %vm143, %v132, 0
    %150 = vmatprep.subr.mxu0 0.0
    %151 = vmatpush1.msra.mxu0 %v135
    %152 = vmatprep.subr.mxu0 0.0
    %153 = vmatpush1.msra.mxu0 %v136
    %154 = vmatprep.subr.mxu0 0.0
    %155 = vmatpush1.msra.mxu0 %v137
    %156 = vmatprep.subr.mxu0 0.0
    %157 = vmatpush1.msra.mxu0 %v138
    %158 = vmatprep.subr.mxu0 0.0
    %159 = vmatpush1.msra.mxu0 %v139
    %160 = vmatprep.subr.mxu0 0.0
    %161 = vmatpush1.msra.mxu0 %v140
    %162 = vmatprep.subr.mxu0 0.0
    %163 = vmatpush1.msra.mxu0 %v141
    %164 = vmatprep.subr.mxu0 0.0
    %165 = vmatpush1.msra.mxu0 %v142
    %166 = vmatprep.subr.mxu0 0.0
    %167 = vmatpush1.msra.mxu0 0.0
    %168 = vmatprep.subr.mxu0 0.0
    %169 = vmatpush1.msra.mxu0 0.0
    %170 = vmatprep.subr.mxu0 0.0
    %171 = vmatpush1.msra.mxu0 0.0
    %172 = vmatprep.subr.mxu0 0.0
    %173 = vmatpush1.msra.mxu0 0.0
    %174 = vmatprep.subr.mxu0 0.0
    %175 = vmatpush1.msra.mxu0 0.0
    %176 = vmatprep.subr.mxu0 0.0
    %177 = vmatpush1.msra.mxu0 0.0
    %178 = vmatprep.subr.mxu0 0.0
    %179 = vmatpush1.msra.mxu0 0.0
    %180 = vmatprep.subr.mxu0 0.0
    %181 = vmatpush1.msra.mxu0 0.0
    %182 = vmatprep.subr.mxu0 0.0
    %183 = vmatpush1.msra.mxu0 0.0
    %184 = vmatprep.subr.mxu0 0.0
    %185 = vmatpush1.msra.mxu0 0.0
    %186 = vmatprep.subr.mxu0 0.0
    %187 = vmatpush1.msra.mxu0 0.0
    %188 = vmatprep.subr.mxu0 0.0
    %189 = vmatpush1.msra.mxu0 0.0
    %190 = vmatprep.subr.mxu0 0.0
    %191 = vmatpush1.msra.mxu0 0.0
    %192 = vmatprep.subr.mxu0 0.0
    %193 = vmatpush1.msra.mxu0 0.0
    %194 = vmatprep.subr.mxu0 0.0
    %195 = vmatpush1.msra.mxu0 0.0
    %196 = vmatprep.subr.mxu0 0.0
    %197 = vmatpush1.msra.mxu0 0.0
    %198 = vmatprep.subr.mxu0 0.0
    %199 = vmatpush1.msra.mxu0 0.0
    %200 = vmatprep.subr.mxu0 0.0
    %201 = vmatpush1.msra.mxu0 0.0
    %202 = vmatprep.subr.mxu0 0.0
    %203 = vmatpush1.msra.mxu0 0.0
    %204 = vmatprep.subr.mxu0 0.0
    %205 = vmatpush1.msra.mxu0 0.0
    %206 = vmatprep.subr.mxu0 0.0
    %207 = vmatpush1.msra.mxu0 0.0
    %208 = vmatprep.subr.mxu0 0.0
    %209 = vmatpush1.msra.mxu0 0.0
    %210 = vmatprep.subr.mxu0 0.0
    %211 = vmatpush1.msra.mxu0 0.0
    %212 = vmatprep.subr.mxu0 0.0
    %213 = vmatpush1.msra.mxu0 0.0
    %214 = vmatprep.mubr.f32.mxu0 0.0
    %215 = vmatmul.mubr.f32.gmra.mrb[0].mxu0 %v145
    %v216 = vpop.f32.mrb[0].mxu0
    %v217 = vadd.f32 0.0, %v216
    %v218 = vpop.f32.mrb[0].mxu0
    %219 = vmatprep.mubr.f32.mxu0 0.0
    %220 = vmatmul.mubr.f32.gmra.mrb[0].mxu0 %v148
    %v221 = vpop.f32.mrb[0].mxu0
    %v222 = vadd.f32 0.0, %v221
    %v223 = vpop.f32.mrb[0].mxu0
    %224 = vdwg.mxu0
    %v225 = vadd.f32 %v133, %v217
    %v226 = vadd.f32 %v134, %v222
    %227 = vst.msk [vmem:[#allocation2] sm:$0xff] %vm41, %v225
    %228 = vst.msk [vmem:[#allocation2 + $0x8] sm:$0xff] %vm41, %v226
    // Predicated region
    $region26: #{tpu_custom_call.1} parent=1 // pred_check
      %p229 = pneg %p21
    $region27: #{tpu_custom_call.1} parent=1 // pred_check_branch
      %231 = sbr.rel (%p229) target = $region29
    $region28: #{tpu_custom_call.1} parent=1 // pred_region
      %v232 = vld [vmem:[#allocation2] sm:$0xff]
      %v233 = vld [vmem:[#allocation2 + $0x8] sm:$0xff]
      %v234 = vld [vmem:[%s4] sm:$0x1]
      %v236 = vlaneseq
      %v237 = vshrl.u32 %v236, 7
      %v238 = vsub.s32 0, %v237
      %v239 = vrot.slane %v234, %v238
      %v241 = vadd.f32 %v232, %v239
      %v242 = vadd.f32 %v233, %v239
      %243 = vst.msk [vmem:[#allocation3] sm:$0xff] %vm41, %v241
      %244 = vst.msk [vmem:[#allocation3 + $0x8] sm:$0xff] %vm41, %v242
    $region29: #{tpu_custom_call.1} parent=1 // pred_fallthru
      _
    // Predicated region
    $region30: #{tpu_custom_call.1} parent=1 // pred_check
      _
    $region31: #{tpu_custom_call.1} parent=1 // pred_check_branch
      %246 = sbr.rel (0) target = $region33
    $region32: #{tpu_custom_call.1} parent=1 // pred_region
      %s248 = ssub.s32 256, 256
      %249 = vsyncadd [#allocation4], %s248
      %s250 = sshll.u32 [#allocation3], 4
      %s251 = int_to_ptr.vmem [resolvable:$true] %s250
      %256 = dma.vmem_to_hbm [thread:$0]  %s251, 256, %s5, [#allocation4], 128, 128, 8
    $region33: #{tpu_custom_call.1} parent=1 // pred_fallthru
      _
    // Predicated region
    $region34: #{tpu_custom_call.1} parent=1 // pred_check
      _
    $region35: #{tpu_custom_call.1} parent=1 // pred_check_branch
      %258 = sbr.rel (0) target = $region37
    $region36: #{tpu_custom_call.1} parent=1 // pred_region
      %259 = dma.done [#allocation4], 256
    $region37: #{tpu_custom_call.1} parent=1 // pred_fallthru
      _
    %260 = vsyncpa [#allocation4], 1

</llo_original>
